<compile_context>
chip_gen: v7x
topology: tpu7x:2x2x1
jax: 0.10.0
libtpu: 0.0.40
codegen_flags: <defaults>
</compile_context>

<pallas_src>
import jax
import jax.numpy as jnp
from jax.experimental import pallas as pl
from jax.experimental.pallas import tpu as pltpu

IN_FEATURES = 784            # 1 * 28 * 28 (flattened MNIST-like image)
IN_PAD = 896                 # 7 * 128 (lane-aligned padded input feature dim, padded on-chip)
H1 = 128
H2 = 64
H2_PAD = 128                 # 64 -> 128 (zero-padded at prep time)
OUT = 32
OUT_PAD = 128                # 32 -> 128 (zero-padded -> lane-dense output store)
TB_MAX = 512                 # batch tile: big enough for the HBM roofline, fits VMEM easily


def encoder_kernel(x_ref, w1_ref, b1_ref, w2_ref, b2_ref, w3_ref, b3_ref, o_ref, xp_ref):
    # Stage the raw f32 input tile into a zero-padded, lane-aligned bf16 VMEM buffer:
    # zero the whole staging buffer, then overwrite the first 784 lanes with the payload.
    # Columns 784..895 stay zero, so the padded rows of w1 contribute nothing.
    xp_ref[...] = jnp.zeros_like(xp_ref)
    xp_ref[:, :IN_FEATURES] = x_ref[...].astype(jnp.bfloat16)

    # Layer 1: [TB, 896] @ [896, 128]  (bf16 on MXU, f32 accumulate) + bias + ReLU.
    h1 = jnp.dot(xp_ref[...], w1_ref[...], preferred_element_type=jnp.float32)
    h1 = jnp.maximum(h1 + b1_ref[...], 0.0)
    # Layer 2: [TB, 128] @ [128, 128]  (output cols 64..127 are zero-padded).
    h2 = jnp.dot(h1.astype(jnp.bfloat16), w2_ref[...], preferred_element_type=jnp.float32)
    h2 = jnp.maximum(h2 + b2_ref[...], 0.0)
    # Layer 3: [TB, 128] @ [128, 128]  (rows 64..127 and cols 32..127 zero-padded).
    h3 = jnp.dot(h2.astype(jnp.bfloat16), w3_ref[...], preferred_element_type=jnp.float32)
    h3 = jnp.maximum(h3 + b3_ref[...], 0.0)
    o_ref[...] = h3.astype(o_ref.dtype)          # lane-dense [TB, 128] f32 store


def encoder_forward(x, prepared_params):
    """x: [B, 784] float32 -> [B, 32] float32 (kernel runs bf16 MXU, f32 accumulate)."""
    w1, b1, w2, b2, w3, b3 = prepared_params
    B = x.shape[0]

    # Batch tile: multiple of 8 sublanes, capped at TB_MAX; pad batch to a tile multiple.
    tb = TB_MAX if B >= TB_MAX else max(8, -(-B // 8) * 8)
    b_pad = -(-B // tb) * tb
    if b_pad != B:
        x = jnp.pad(x, ((0, b_pad - B), (0, 0)))
    grid = (b_pad // tb,)

    def resident(shape):
        # Weights / biases: one block = whole array, same block every grid step.
        return pl.BlockSpec(shape, lambda i: (0, 0))

    flops = 2 * b_pad * (IN_PAD * H1 + H1 * H2_PAD + H2_PAD * OUT_PAD)
    bytes_accessed = (
        b_pad * IN_FEATURES * 4                               # x (f32, read once)
        + (w1.size + w2.size + w3.size) * 2                   # weights (bf16, resident)
        + (b1.size + b2.size + b3.size) * 4                   # biases (f32, resident)
        + b_pad * OUT_PAD * 4                                 # output (f32)
    )

    out = pl.pallas_call(
        encoder_kernel,
        out_shape=jax.ShapeDtypeStruct((b_pad, OUT_PAD), jnp.float32),
        grid=grid,
        in_specs=[
            pl.BlockSpec((tb, IN_FEATURES), lambda i: (i, 0)),  # x: tiled over batch only
            resident((IN_PAD, H1)),
            resident((1, H1)),
            resident((H1, H2_PAD)),
            resident((1, H2_PAD)),
            resident((H2_PAD, OUT_PAD)),
            resident((1, OUT_PAD)),
        ],
        out_specs=pl.BlockSpec((tb, OUT_PAD), lambda i: (i, 0)),
        scratch_shapes=[pltpu.VMEM((tb, IN_PAD), jnp.bfloat16)],  # padded x staging buffer
        compiler_params=pltpu.CompilerParams(
            dimension_semantics=("parallel",)),               # shard batch across TCs (v7x)
        cost_estimate=pl.CostEstimate(
            flops=flops, transcendentals=0, bytes_accessed=bytes_accessed),
    )(x, w1, b1, w2, b2, w3, b3)

    return out[:B, :OUT]


def init_params(key, input_size):
    """PyTorch nn.Linear default init (uniform +/- 1/sqrt(fan_in)); weights as [in, out]."""
    dims = [(input_size, H1), (H1, H2), (H2, OUT)]
    params = []
    for fan_in, fan_out in dims:
        key, kw, kb = jax.random.split(key, 3)
        bound = 1.0 / (fan_in ** 0.5)
        w = jax.random.uniform(kw, (fan_in, fan_out), jnp.float32, -bound, bound)
        b = jax.random.uniform(kb, (1, fan_out), jnp.float32, -bound, bound)
        params += [w, b]
    return tuple(params)


def prepare_params(params):
    """Zero-pad feature dims to MXU-friendly sizes; cast weights to bf16, keep biases f32."""
    w1, b1, w2, b2, w3, b3 = params
    w1p = jnp.pad(w1, ((0, IN_PAD - w1.shape[0]), (0, 0))).astype(jnp.bfloat16)
    b1p = b1.astype(jnp.float32)
    w2p = jnp.pad(w2, ((0, 0), (0, H2_PAD - w2.shape[1]))).astype(jnp.bfloat16)
    b2p = jnp.pad(b2, ((0, 0), (0, H2_PAD - b2.shape[1]))).astype(jnp.float32)
    w3p = jnp.pad(w3, ((0, H2_PAD - w3.shape[0]), (0, OUT_PAD - w3.shape[1]))).astype(jnp.bfloat16)
    b3p = jnp.pad(b3, ((0, 0), (0, OUT_PAD - b3.shape[1]))).astype(jnp.float32)
    return (w1p, b1p, w2p, b2p, w3p, b3p)


def encoder_ref_f32(x, params):
    """Pure-f32 reference matching the PyTorch module."""
    w1, b1, w2, b2, w3, b3 = params
    h = jnp.maximum(x @ w1 + b1, 0.0)
    h = jnp.maximum(h @ w2 + b2, 0.0)
    return jnp.maximum(h @ w3 + b3, 0.0)


def encoder_ref_bf16(x, prepared_params):
    """Reference mimicking the kernel's bf16-input / f32-accumulate arithmetic."""
    w1, b1, w2, b2, w3, b3 = prepared_params
    xb = jnp.pad(x.astype(jnp.bfloat16), ((0, 0), (0, IN_PAD - x.shape[1])))
    h = jnp.maximum(xb.astype(jnp.float32) @ w1.astype(jnp.float32) + b1, 0.0)
    h = jnp.maximum(h.astype(jnp.bfloat16).astype(jnp.float32) @ w2.astype(jnp.float32) + b2, 0.0)
    h = jnp.maximum(h.astype(jnp.bfloat16).astype(jnp.float32) @ w3.astype(jnp.float32) + b3, 0.0)
    return h[:, :OUT]


if __name__ == "__main__":
    key = jax.random.PRNGKey(0)

    batch_size = 8
    C, H, W = 1, 28, 28                  # MNIST-like image implied by the flatten
    input_size = C * H * W               # 784

    key, kx = jax.random.split(key)
    images = jax.random.normal(kx, (batch_size, C, H, W), jnp.float32)   # NCHW
    x = images.reshape(batch_size, -1)   # [B, input_size], matches torch reshape([B, -1])

    params = init_params(key, input_size)
    prepared = prepare_params(params)

    fwd = jax.jit(encoder_forward)
    out = fwd(x, prepared)
    out = jax.block_until_ready(out)

    assert out.shape == (batch_size, OUT)

    # Tight check against a bf16-matched reference.
    ref_bf16 = encoder_ref_bf16(x, prepared)
    assert jnp.allclose(out, ref_bf16, atol=1e-2, rtol=1e-2)

    # Looser sanity check against the pure-f32 PyTorch-equivalent reference.
    ref_f32 = encoder_ref_f32(x, params)
    assert jnp.allclose(out, ref_f32, atol=5e-2, rtol=5e-2)

    print("KERNEL_OK")
</pallas_src>

<mosaic_0001>
module attributes {stable_mosaic.version = 11 : i64} {
  func.func @encoder_kernel(%arg0: i32, %arg1: memref<8x784xf32, #tpu.memory_space<vmem>>, %arg2: memref<896x128xbf16, #tpu.memory_space<vmem>>, %arg3: memref<1x128xf32, #tpu.memory_space<vmem>>, %arg4: memref<128x128xbf16, #tpu.memory_space<vmem>>, %arg5: memref<1x128xf32, #tpu.memory_space<vmem>>, %arg6: memref<128x128xbf16, #tpu.memory_space<vmem>>, %arg7: memref<1x128xf32, #tpu.memory_space<vmem>>, %arg8: memref<8x128xf32, #tpu.memory_space<vmem>>, %arg9: memref<8x896xbf16, #tpu.memory_space<vmem>>) attributes {dimension_semantics = [#tpu.dimension_semantics<parallel>], iteration_bounds = array<i64: 1>, scalar_prefetch = 0 : i64, scratch_operands = 1 : i64, tpu.core_type = #tpu.core_type<tc>, window_params = [{transform_indices = @transform_0, window_bounds = array<i64: 8, 784>}, {pipeline_mode = #tpu.pipeline_mode<synchronous>, transform_indices = @transform_1, window_bounds = array<i64: 896, 128>}, {pipeline_mode = #tpu.pipeline_mode<synchronous>, transform_indices = @transform_2, window_bounds = array<i64: 1, 128>}, {pipeline_mode = #tpu.pipeline_mode<synchronous>, transform_indices = @transform_3, window_bounds = array<i64: 128, 128>}, {pipeline_mode = #tpu.pipeline_mode<synchronous>, transform_indices = @transform_4, window_bounds = array<i64: 1, 128>}, {pipeline_mode = #tpu.pipeline_mode<synchronous>, transform_indices = @transform_5, window_bounds = array<i64: 128, 128>}, {pipeline_mode = #tpu.pipeline_mode<synchronous>, transform_indices = @transform_6, window_bounds = array<i64: 1, 128>}, {transform_indices = @transform_7, window_bounds = array<i64: 8, 128>}]} {
    %cst = arith.constant 0.000000e+00 : bf16
    %0 = vector.broadcast %cst : bf16 to vector<8x896xbf16>
    %c0 = arith.constant 0 : index
    %c0_0 = arith.constant 0 : index
    %1 = vector.load %arg9[%c0, %c0_0] : memref<8x896xbf16, #tpu.memory_space<vmem>>, vector<8x896xbf16>
    tpu.vector_store %arg9[%c0, %c0_0], %0 {strides = array<i32>} : memref<8x896xbf16, #tpu.memory_space<vmem>>, vector<8x896xbf16>,
    %c0_1 = arith.constant 0 : index
    %c0_2 = arith.constant 0 : index
    %2 = vector.load %arg1[%c0_1, %c0_2] : memref<8x784xf32, #tpu.memory_space<vmem>>, vector<8x784xf32>
    %3 = arith.truncf %2 : vector<8x784xf32> to vector<8x784xbf16>
    %c0_3 = arith.constant 0 : index
    %c0_4 = arith.constant 0 : index
    %4 = vector.load %arg9[%c0_3, %c0_4] : memref<8x896xbf16, #tpu.memory_space<vmem>>, vector<8x784xbf16>
    tpu.vector_store %arg9[%c0_3, %c0_4], %3 {strides = array<i32>} : memref<8x896xbf16, #tpu.memory_space<vmem>>, vector<8x784xbf16>,
    %c0_5 = arith.constant 0 : index
    %c0_6 = arith.constant 0 : index
    %5 = vector.load %arg9[%c0_5, %c0_6] : memref<8x896xbf16, #tpu.memory_space<vmem>>, vector<8x896xbf16>
    %c0_7 = arith.constant 0 : index
    %c0_8 = arith.constant 0 : index
    %6 = vector.load %arg2[%c0_7, %c0_8] : memref<896x128xbf16, #tpu.memory_space<vmem>>, vector<896x128xbf16>
    %cst_9 = arith.constant dense<0.000000e+00> : vector<8x128xf32>
    %7 = tpu.matmul %5, %6, %cst_9 {dimension_numbers = #tpu.dot_dimension_numbers<[1], [0], [0], [1], [0, 0, 1, 1], [], []>} : vector<8x896xbf16>, vector<896x128xbf16>, vector<8x128xf32> -> vector<8x128xf32>
    %c0_10 = arith.constant 0 : index
    %c0_11 = arith.constant 0 : index
    %8 = vector.load %arg3[%c0_10, %c0_11] : memref<1x128xf32, #tpu.memory_space<vmem>>, vector<1x128xf32>
    %9 = vector.broadcast %8 : vector<1x128xf32> to vector<8x128xf32>
    %10 = arith.addf %7, %9 : vector<8x128xf32>
    %cst_12 = arith.constant 0.000000e+00 : f32
    %11 = vector.broadcast %cst_12 : f32 to vector<8x128xf32>
    %12 = arith.maximumf %10, %11 : vector<8x128xf32>
    %13 = arith.truncf %12 : vector<8x128xf32> to vector<8x128xbf16>
    %c0_13 = arith.constant 0 : index
    %c0_14 = arith.constant 0 : index
    %14 = vector.load %arg4[%c0_13, %c0_14] : memref<128x128xbf16, #tpu.memory_space<vmem>>, vector<128x128xbf16>
    %cst_15 = arith.constant dense<0.000000e+00> : vector<8x128xf32>
    %15 = tpu.matmul %13, %14, %cst_15 {dimension_numbers = #tpu.dot_dimension_numbers<[1], [0], [0], [1], [0, 0, 1, 1], [], []>} : vector<8x128xbf16>, vector<128x128xbf16>, vector<8x128xf32> -> vector<8x128xf32>
    %c0_16 = arith.constant 0 : index
    %c0_17 = arith.constant 0 : index
    %16 = vector.load %arg5[%c0_16, %c0_17] : memref<1x128xf32, #tpu.memory_space<vmem>>, vector<1x128xf32>
    %17 = vector.broadcast %16 : vector<1x128xf32> to vector<8x128xf32>
    %18 = arith.addf %15, %17 : vector<8x128xf32>
    %cst_18 = arith.constant 0.000000e+00 : f32
    %19 = vector.broadcast %cst_18 : f32 to vector<8x128xf32>
    %20 = arith.maximumf %18, %19 : vector<8x128xf32>
    %21 = arith.truncf %20 : vector<8x128xf32> to vector<8x128xbf16>
    %c0_19 = arith.constant 0 : index
    %c0_20 = arith.constant 0 : index
    %22 = vector.load %arg6[%c0_19, %c0_20] : memref<128x128xbf16, #tpu.memory_space<vmem>>, vector<128x128xbf16>
    %cst_21 = arith.constant dense<0.000000e+00> : vector<8x128xf32>
    %23 = tpu.matmul %21, %22, %cst_21 {dimension_numbers = #tpu.dot_dimension_numbers<[1], [0], [0], [1], [0, 0, 1, 1], [], []>} : vector<8x128xbf16>, vector<128x128xbf16>, vector<8x128xf32> -> vector<8x128xf32>
    %c0_22 = arith.constant 0 : index
    %c0_23 = arith.constant 0 : index
    %24 = vector.load %arg7[%c0_22, %c0_23] : memref<1x128xf32, #tpu.memory_space<vmem>>, vector<1x128xf32>
    %25 = vector.broadcast %24 : vector<1x128xf32> to vector<8x128xf32>
    %26 = arith.addf %23, %25 : vector<8x128xf32>
    %cst_24 = arith.constant 0.000000e+00 : f32
    %27 = vector.broadcast %cst_24 : f32 to vector<8x128xf32>
    %28 = arith.maximumf %26, %27 : vector<8x128xf32>
    %c0_25 = arith.constant 0 : index
    %c0_26 = arith.constant 0 : index
    %29 = vector.load %arg8[%c0_25, %c0_26] : memref<8x128xf32, #tpu.memory_space<vmem>>, vector<8x128xf32>
    tpu.vector_store %arg8[%c0_25, %c0_26], %28 {strides = array<i32>} : memref<8x128xf32, #tpu.memory_space<vmem>>, vector<8x128xf32>,
    return
  }
  func.func @transform_0(%arg0: i32) -> (i32, i32) {
    %c0_i32 = arith.constant 0 : i32
    %c0_i32_0 = arith.constant 0 : i32
    return %arg0, %c0_i32 : i32, i32
  }
  func.func @transform_1(%arg0: i32) -> (i32, i32) {
    %c0_i32 = arith.constant 0 : i32
    %c0_i32_0 = arith.constant 0 : i32
    %c0_i32_1 = arith.constant 0 : i32
    return %c0_i32, %c0_i32_0 : i32, i32
  }
  func.func @transform_2(%arg0: i32) -> (i32, i32) {
    %c0_i32 = arith.constant 0 : i32
    %c0_i32_0 = arith.constant 0 : i32
    %c0_i32_1 = arith.constant 0 : i32
    return %c0_i32, %c0_i32_0 : i32, i32
  }
  func.func @transform_3(%arg0: i32) -> (i32, i32) {
    %c0_i32 = arith.constant 0 : i32
    %c0_i32_0 = arith.constant 0 : i32
    %c0_i32_1 = arith.constant 0 : i32
    return %c0_i32, %c0_i32_0 : i32, i32
  }
  func.func @transform_4(%arg0: i32) -> (i32, i32) {
    %c0_i32 = arith.constant 0 : i32
    %c0_i32_0 = arith.constant 0 : i32
    %c0_i32_1 = arith.constant 0 : i32
    return %c0_i32, %c0_i32_0 : i32, i32
  }
  func.func @transform_5(%arg0: i32) -> (i32, i32) {
    %c0_i32 = arith.constant 0 : i32
    %c0_i32_0 = arith.constant 0 : i32
    %c0_i32_1 = arith.constant 0 : i32
    return %c0_i32, %c0_i32_0 : i32, i32
  }
  func.func @transform_6(%arg0: i32) -> (i32, i32) {
    %c0_i32 = arith.constant 0 : i32
    %c0_i32_0 = arith.constant 0 : i32
    %c0_i32_1 = arith.constant 0 : i32
    return %c0_i32, %c0_i32_0 : i32, i32
  }
  func.func @transform_7(%arg0: i32) -> (i32, i32) {
    %c0_i32 = arith.constant 0 : i32
    %c0_i32_0 = arith.constant 0 : i32
    return %arg0, %c0_i32 : i32, i32
  }
}

</mosaic_0001>

<llo_original>
// kernel: encoder_forward.1
$region0: #{encoder_forward.1}
  #allocation0 [shape = 'u32[]', space=smem, size = 0x4, offset = 0x4, fixed_abs, tag = 'smem constant byte address 0x4 - core index']
  #allocation1 [shape = 'u32[144,128]{1,0:T(1,128)}', space=vmem, size = 0x12000, scoped, tag = 'internal scratch']
  #allocation2 [shape = 'bf16[8,896]{1,0:T(8,128)(2,1)}', space=vmem, size = 0x3800, scoped, tag = 'scratch operand']
  %s0 = inlined_call_operand.hbm [shape: f32[8,784], index: 0, kind: input, shape index: {}]
  %s1 = inlined_call_operand.hbm [shape: bf16[896,128], index: 1, kind: input, shape index: {}]
  %s2 = inlined_call_operand.vmem [shape: f32[1,128], index: 2, kind: input, shape index: {}]
  %s3 = inlined_call_operand.hbm [shape: bf16[128,128], index: 3, kind: input, shape index: {}]
  %s4 = inlined_call_operand.vmem [shape: f32[1,128], index: 4, kind: input, shape index: {}]
  %s5 = inlined_call_operand.hbm [shape: bf16[128,128], index: 5, kind: input, shape index: {}]
  %s6 = inlined_call_operand.vmem [shape: f32[1,128], index: 6, kind: input, shape index: {}]
  %s7 = inlined_call_operand.hbm [shape: f32[8,128], index: 7, kind: output, shape index: {}]
  %s8 = sld [smem:[#allocation0]]
  $region54: #{encoder_forward.1} parent=0
    _
  %s10 = ssub.s32 1, %s8
  %s11 = scalar_select 0, %s10, %s8
  $region1: #{encoder_forward.1} parent=0
    #allocation3 [shape = 'u8[28672]{0}', space=vmem, size = 0x7000, scoped, tag = 'input window, operand 0, single buffered']
    #allocation4 [shape = 's32[1]{0}', space=sflag, size = 0x4, scoped, tag = 'scoped memory for encoder_forward.1']
    #allocation5 [shape = 's32[1]{0}', space=sflag, size = 0x4, scoped, tag = 'scoped memory for encoder_forward.1']
    #allocation6 [shape = 'u8[229376]{0}', space=vmem, size = 0x38000, scoped, tag = 'input window, operand 1, single buffered']
    #allocation7 [shape = 's32[1]{0}', space=sflag, size = 0x4, scoped, tag = 'scoped memory for encoder_forward.1']
    #allocation8 [shape = 'u8[32768]{0}', space=vmem, size = 0x8000, scoped, tag = 'input window, operand 3, single buffered']
    #allocation9 [shape = 'u8[32768]{0}', space=vmem, size = 0x8000, scoped, tag = 'input window, operand 5, single buffered']
    #allocation10 [shape = 's32[1]{0}', space=sflag, size = 0x4, scoped, tag = 'scoped memory for encoder_forward.1']
    #allocation11 [shape = 'u8[4096]{0}', space=vmem, size = 0x1000, scoped, tag = 'output window, operand 0, single buffered']
    %12 = vsyncpa [#allocation4], 0
    %13 = vsyncpa [#allocation7], 0
    %14 = vsyncpa [#allocation10], 0
    %15 = vsyncpa [#allocation5], 0
    // Predicated region
    $region2: #{encoder_forward.1} parent=1 // pred_check
      _
    $region3: #{encoder_forward.1} parent=1 // pred_check_branch
      %17 = sbr.rel (0) target = $region5
    $region4: #{encoder_forward.1} parent=1 // pred_region
      %s19 = ssub.s32 896, 896
      %20 = vsyncadd [#allocation4], %s19
      %s22 = sshll.u32 [#allocation3], 4
      %s23 = int_to_ptr.vmem [resolvable:$true] %s22
      %25 = dma.hbm_to_vmem [thread:$0]  %s0, 896, %s23, [#allocation4]
    $region5: #{encoder_forward.1} parent=1 // pred_fallthru
      _
    // Predicated region
    $region6: #{encoder_forward.1} parent=1 // pred_check
      _
    $region7: #{encoder_forward.1} parent=1 // pred_check_branch
      %27 = sbr.rel (0) target = $region9
    $region8: #{encoder_forward.1} parent=1 // pred_region
      %s29 = ssub.s32 7168, 7168
      %30 = vsyncadd [#allocation7], %s29
      %s31 = sshll.u32 [#allocation6], 4
      %s32 = int_to_ptr.vmem [resolvable:$true] %s31
      %37 = dma.hbm_to_vmem [thread:$0]  %s1, 7168, %s32, [#allocation7], 64, 64, 4
    $region9: #{encoder_forward.1} parent=1 // pred_fallthru
      _
    // Predicated region
    $region10: #{encoder_forward.1} parent=1 // pred_check
      _
    $region11: #{encoder_forward.1} parent=1 // pred_check_branch
      %39 = sbr.rel (0) target = $region13
    $region12: #{encoder_forward.1} parent=1 // pred_region
      _
    $region13: #{encoder_forward.1} parent=1 // pred_fallthru
      _
    // Predicated region
    $region14: #{encoder_forward.1} parent=1 // pred_check
      _
    $region15: #{encoder_forward.1} parent=1 // pred_check_branch
      %41 = sbr.rel (0) target = $region17
    $region16: #{encoder_forward.1} parent=1 // pred_region
      %s43 = ssub.s32 1024, 1024
      %44 = vsyncadd [#allocation7], %s43
      %s45 = sshll.u32 [#allocation8], 4
      %s46 = int_to_ptr.vmem [resolvable:$true] %s45
      %51 = dma.hbm_to_vmem [thread:$0]  %s3, 1024, %s46, [#allocation7], 64, 64, 4
    $region17: #{encoder_forward.1} parent=1 // pred_fallthru
      _
    // Predicated region
    $region18: #{encoder_forward.1} parent=1 // pred_check
      _
    $region19: #{encoder_forward.1} parent=1 // pred_check_branch
      %53 = sbr.rel (0) target = $region21
    $region20: #{encoder_forward.1} parent=1 // pred_region
      _
    $region21: #{encoder_forward.1} parent=1 // pred_fallthru
      _
    // Predicated region
    $region22: #{encoder_forward.1} parent=1 // pred_check
      _
    $region23: #{encoder_forward.1} parent=1 // pred_check_branch
      %55 = sbr.rel (0) target = $region25
    $region24: #{encoder_forward.1} parent=1 // pred_region
      %s57 = ssub.s32 1024, 1024
      %58 = vsyncadd [#allocation10], %s57
      %s59 = sshll.u32 [#allocation9], 4
      %s60 = int_to_ptr.vmem [resolvable:$true] %s59
      %65 = dma.hbm_to_vmem [thread:$0]  %s5, 1024, %s60, [#allocation10], 64, 64, 4
    $region25: #{encoder_forward.1} parent=1 // pred_fallthru
      _
    // Predicated region
    $region26: #{encoder_forward.1} parent=1 // pred_check
      _
    $region27: #{encoder_forward.1} parent=1 // pred_check_branch
      %67 = sbr.rel (0) target = $region29
    $region28: #{encoder_forward.1} parent=1 // pred_region
      _
    $region29: #{encoder_forward.1} parent=1 // pred_fallthru
      _
    // Predicated region
    $region30: #{encoder_forward.1} parent=1 // pred_check
      _
    $region31: #{encoder_forward.1} parent=1 // pred_check_branch
      %69 = sbr.rel (0) target = $region33
    $region32: #{encoder_forward.1} parent=1 // pred_region
      %70 = dma.done [#allocation4], 896
    $region33: #{encoder_forward.1} parent=1 // pred_fallthru
      _
    // Predicated region
    $region34: #{encoder_forward.1} parent=1 // pred_check
      _
    $region35: #{encoder_forward.1} parent=1 // pred_check_branch
      %72 = sbr.rel (0) target = $region37
    $region36: #{encoder_forward.1} parent=1 // pred_region
      %73 = dma.done [#allocation7], 7168
    $region37: #{encoder_forward.1} parent=1 // pred_fallthru
      _
    // Predicated region
    $region38: #{encoder_forward.1} parent=1 // pred_check
      _
    $region39: #{encoder_forward.1} parent=1 // pred_check_branch
      %75 = sbr.rel (0) target = $region41
    $region40: #{encoder_forward.1} parent=1 // pred_region
      %76 = dma.done [#allocation7], 1024
    $region41: #{encoder_forward.1} parent=1 // pred_fallthru
      _
    // Predicated region
    $region42: #{encoder_forward.1} parent=1 // pred_check
      _
    $region43: #{encoder_forward.1} parent=1 // pred_check_branch
      %78 = sbr.rel (0) target = $region45
    $region44: #{encoder_forward.1} parent=1 // pred_region
      %79 = dma.done [#allocation10], 1024
    $region45: #{encoder_forward.1} parent=1 // pred_fallthru
      _
    %81 = vst [vmem:[#allocation2] sm:$0xff] 0
    %82 = vst [vmem:[#allocation2 + $0x8] sm:$0xff] 0
    %83 = vst [vmem:[#allocation2 + $0x10] sm:$0xff] 0
    %84 = vst [vmem:[#allocation2 + $0x18] sm:$0xf] 0
    %v85 = vld [vmem:[#allocation3] sm:$0xff]
    %v86 = vld [vmem:[#allocation3 + $0x8] sm:$0xff]
    %v87 = vld [vmem:[#allocation3 + $0x10] sm:$0xff]
    %v88 = vld [vmem:[#allocation3 + $0x18] sm:$0xff]
    %v89 = vld [vmem:[#allocation3 + $0x20] sm:$0xff]
    %v90 = vld [vmem:[#allocation3 + $0x28] sm:$0xff]
    %v91 = vld [vmem:[#allocation3 + $0x30] sm:$0xff]
    %v92 = vpack.c.bf16 %v85, %v85
    %v93 = vpack.c.bf16 %v86, %v86
    %v94 = vpack.c.bf16 %v87, %v87
    %v95 = vpack.c.bf16 %v88, %v88
    %v96 = vpack.c.bf16 %v89, %v89
    %v97 = vpack.c.bf16 %v90, %v90
    %v98 = vpack.c.bf16 %v91, %v91
    %v106 = vunpack.c.l.b16 %v92
    %v107 = vunpack.c.l.b16 %v93
    %v108 = vunpack.c.l.b16 %v94
    %v109 = vunpack.c.l.b16 %v95
    %v110 = vunpack.c.l.b16 %v96
    %v111 = vunpack.c.l.b16 %v97
    %v112 = vunpack.c.l.b16 %v98
    %v113 = vpack.c.b16 %v107, %v106
    %v114 = vpack.c.b16 %v109, %v108
    %v115 = vpack.c.b16 %v111, %v110
    %v116 = vpack.c.b16 %v112, %v112
    %121 = vst [vmem:[#allocation2] sm:$0xff] %v113
    %122 = vst [vmem:[#allocation2 + $0x8] sm:$0xff] %v114
    %123 = vst [vmem:[#allocation2 + $0x10] sm:$0xff] %v115
    %vm124 = vcmask 125952
    %125 = vst.msk [vmem:[#allocation2 + $0x18] sm:$0xf] %vm124, %v116
    %v126 = vld [vmem:[#allocation2] sm:$0xff]
    %v127 = vld [vmem:[#allocation2 + $0x8] sm:$0xff]
    %v128 = vld [vmem:[#allocation2 + $0x10] sm:$0xff]
    %v129 = vld [vmem:[#allocation2 + $0x18] sm:$0xf]
    %v130 = vld [vmem:[#allocation6] sm:$0xf]
    %v131 = vld [vmem:[#allocation6 + $0x4] sm:$0xf]
    %v132 = vld [vmem:[#allocation6 + $0x8] sm:$0xf]
    %v133 = vld [vmem:[#allocation6 + $0xc] sm:$0xf]
    %v134 = vld [vmem:[#allocation6 + $0x10] sm:$0xf]
    %v135 = vld [vmem:[#allocation6 + $0x14] sm:$0xf]
    %v136 = vld [vmem:[#allocation6 + $0x18] sm:$0xf]
    %v137 = vld [vmem:[#allocation6 + $0x1c] sm:$0xf]
    %v138 = vld [vmem:[#allocation6 + $0x20] sm:$0xf]
    %v139 = vld [vmem:[#allocation6 + $0x24] sm:$0xf]
    %v140 = vld [vmem:[#allocation6 + $0x28] sm:$0xf]
    %v141 = vld [vmem:[#allocation6 + $0x2c] sm:$0xf]
    %v142 = vld [vmem:[#allocation6 + $0x30] sm:$0xf]
    %v143 = vld [vmem:[#allocation6 + $0x34] sm:$0xf]
    %v144 = vld [vmem:[#allocation6 + $0x38] sm:$0xf]
    %v145 = vld [vmem:[#allocation6 + $0x3c] sm:$0xf]
    %v146 = vld [vmem:[#allocation6 + $0x40] sm:$0xf]
    %v147 = vld [vmem:[#allocation6 + $0x44] sm:$0xf]
    %v148 = vld [vmem:[#allocation6 + $0x48] sm:$0xf]
    %v149 = vld [vmem:[#allocation6 + $0x4c] sm:$0xf]
    %v150 = vld [vmem:[#allocation6 + $0x50] sm:$0xf]
    %v151 = vld [vmem:[#allocation6 + $0x54] sm:$0xf]
    %v152 = vld [vmem:[#allocation6 + $0x58] sm:$0xf]
    %v153 = vld [vmem:[#allocation6 + $0x5c] sm:$0xf]
    %v154 = vld [vmem:[#allocation6 + $0x60] sm:$0xf]
    %v155 = vld [vmem:[#allocation6 + $0x64] sm:$0xf]
    %v156 = vld [vmem:[#allocation6 + $0x68] sm:$0xf]
    %v157 = vld [vmem:[#allocation6 + $0x6c] sm:$0xf]
    %v158 = vld [vmem:[#allocation6 + $0x70] sm:$0xf]
    %v159 = vld [vmem:[#allocation6 + $0x74] sm:$0xf]
    %v160 = vld [vmem:[#allocation6 + $0x78] sm:$0xf]
    %v161 = vld [vmem:[#allocation6 + $0x7c] sm:$0xf]
    %v162 = vld [vmem:[#allocation6 + $0x80] sm:$0xf]
    %v163 = vld [vmem:[#allocation6 + $0x84] sm:$0xf]
    %v164 = vld [vmem:[#allocation6 + $0x88] sm:$0xf]
    %v165 = vld [vmem:[#allocation6 + $0x8c] sm:$0xf]
    %v166 = vld [vmem:[#allocation6 + $0x90] sm:$0xf]
    %v167 = vld [vmem:[#allocation6 + $0x94] sm:$0xf]
    %v168 = vld [vmem:[#allocation6 + $0x98] sm:$0xf]
    %v169 = vld [vmem:[#allocation6 + $0x9c] sm:$0xf]
    %v170 = vld [vmem:[#allocation6 + $0xa0] sm:$0xf]
    %v171 = vld [vmem:[#allocation6 + $0xa4] sm:$0xf]
    %v172 = vld [vmem:[#allocation6 + $0xa8] sm:$0xf]
    %v173 = vld [vmem:[#allocation6 + $0xac] sm:$0xf]
    %v174 = vld [vmem:[#allocation6 + $0xb0] sm:$0xf]
    %v175 = vld [vmem:[#allocation6 + $0xb4] sm:$0xf]
    %v176 = vld [vmem:[#allocation6 + $0xb8] sm:$0xf]
    %v177 = vld [vmem:[#allocation6 + $0xbc] sm:$0xf]
    %v178 = vld [vmem:[#allocation6 + $0xc0] sm:$0xf]
    %v179 = vld [vmem:[#allocation6 + $0xc4] sm:$0xf]
    %v180 = vld [vmem:[#allocation6 + $0xc8] sm:$0xf]
    %v181 = vld [vmem:[#allocation6 + $0xcc] sm:$0xf]
    %v182 = vld [vmem:[#allocation6 + $0xd0] sm:$0xf]
    %v183 = vld [vmem:[#allocation6 + $0xd4] sm:$0xf]
    %v184 = vld [vmem:[#allocation6 + $0xd8] sm:$0xf]
    %v185 = vld [vmem:[#allocation6 + $0xdc] sm:$0xf]
    %v186 = vld [vmem:[#allocation6 + $0xe0] sm:$0xf]
    %v187 = vld [vmem:[#allocation6 + $0xe4] sm:$0xf]
    %v188 = vld [vmem:[#allocation6 + $0xe8] sm:$0xf]
    %v189 = vld [vmem:[#allocation6 + $0xec] sm:$0xf]
    %v190 = vld [vmem:[#allocation6 + $0xf0] sm:$0xf]
    %v191 = vld [vmem:[#allocation6 + $0xf4] sm:$0xf]
    %v192 = vld [vmem:[#allocation6 + $0xf8] sm:$0xf]
    %v193 = vld [vmem:[#allocation6 + $0xfc] sm:$0xf]
    %v194 = vld [vmem:[#allocation6 + $0x100] sm:$0xf]
    %v195 = vld [vmem:[#allocation6 + $0x104] sm:$0xf]
    %v196 = vld [vmem:[#allocation6 + $0x108] sm:$0xf]
    %v197 = vld [vmem:[#allocation6 + $0x10c] sm:$0xf]
    %v198 = vld [vmem:[#allocation6 + $0x110] sm:$0xf]
    %v199 = vld [vmem:[#allocation6 + $0x114] sm:$0xf]
    %v200 = vld [vmem:[#allocation6 + $0x118] sm:$0xf]
    %v201 = vld [vmem:[#allocation6 + $0x11c] sm:$0xf]
    %v202 = vld [vmem:[#allocation6 + $0x120] sm:$0xf]
    %v203 = vld [vmem:[#allocation6 + $0x124] sm:$0xf]
    %v204 = vld [vmem:[#allocation6 + $0x128] sm:$0xf]
    %v205 = vld [vmem:[#allocation6 + $0x12c] sm:$0xf]
    %v206 = vld [vmem:[#allocation6 + $0x130] sm:$0xf]
    %v207 = vld [vmem:[#allocation6 + $0x134] sm:$0xf]
    %v208 = vld [vmem:[#allocation6 + $0x138] sm:$0xf]
    %v209 = vld [vmem:[#allocation6 + $0x13c] sm:$0xf]
    %v210 = vld [vmem:[#allocation6 + $0x140] sm:$0xf]
    %v211 = vld [vmem:[#allocation6 + $0x144] sm:$0xf]
    %v212 = vld [vmem:[#allocation6 + $0x148] sm:$0xf]
    %v213 = vld [vmem:[#allocation6 + $0x14c] sm:$0xf]
    %v214 = vld [vmem:[#allocation6 + $0x150] sm:$0xf]
    %v215 = vld [vmem:[#allocation6 + $0x154] sm:$0xf]
    %v216 = vld [vmem:[#allocation6 + $0x158] sm:$0xf]
    %v217 = vld [vmem:[#allocation6 + $0x15c] sm:$0xf]
    %v218 = vld [vmem:[#allocation6 + $0x160] sm:$0xf]
    %v219 = vld [vmem:[#allocation6 + $0x164] sm:$0xf]
    %v220 = vld [vmem:[#allocation6 + $0x168] sm:$0xf]
    %v221 = vld [vmem:[#allocation6 + $0x16c] sm:$0xf]
    %v222 = vld [vmem:[#allocation6 + $0x170] sm:$0xf]
    %v223 = vld [vmem:[#allocation6 + $0x174] sm:$0xf]
    %v224 = vld [vmem:[#allocation6 + $0x178] sm:$0xf]
    %v225 = vld [vmem:[#allocation6 + $0x17c] sm:$0xf]
    %v226 = vld [vmem:[#allocation6 + $0x180] sm:$0xf]
    %v227 = vld [vmem:[#allocation6 + $0x184] sm:$0xf]
    %v228 = vld [vmem:[#allocation6 + $0x188] sm:$0xf]
    %v229 = vld [vmem:[#allocation6 + $0x18c] sm:$0xf]
    %v230 = vld [vmem:[#allocation6 + $0x190] sm:$0xf]
    %v231 = vld [vmem:[#allocation6 + $0x194] sm:$0xf]
    %v232 = vld [vmem:[#allocation6 + $0x198] sm:$0xf]
    %v233 = vld [vmem:[#allocation6 + $0x19c] sm:$0xf]
    %v234 = vld [vmem:[#allocation6 + $0x1a0] sm:$0xf]
    %v235 = vld [vmem:[#allocation6 + $0x1a4] sm:$0xf]
    %v236 = vld [vmem:[#allocation6 + $0x1a8] sm:$0xf]
    %v237 = vld [vmem:[#allocation6 + $0x1ac] sm:$0xf]
    %v238 = vld [vmem:[#allocation6 + $0x1b0] sm:$0xf]
    %v239 = vld [vmem:[#allocation6 + $0x1b4] sm:$0xf]
    %v240 = vld [vmem:[#allocation6 + $0x1b8] sm:$0xf]
    %v241 = vld [vmem:[#allocation6 + $0x1bc] sm:$0xf]
    %v242 = vld [vmem:[%s2] sm:$0x1]
    %v244 = vlaneseq
    %v245 = vshrl.u32 %v244, 7
    %v246 = vsub.s32 0, %v245
    %v247 = vrot.slane %v242, %v246
    %v253 = vunpack.c.l.b16 %v126
    %v254 = vunpack.c.h.b16 %v126
    %v255 = vunpack.c.l.b16 %v127
    %v256 = vunpack.c.h.b16 %v127
    %v257 = vunpack.c.l.b16 %v128
    %v258 = vunpack.c.h.b16 %v128
    %v259 = vunpack.c.l.b16 %v129
    %v260 = vpack.c.b16 %v253, %v253
    %v261 = vpack.c.b16 %v254, %v254
    %v262 = vpack.c.b16 %v255, %v255
    %v263 = vpack.c.b16 %v256, %v256
    %v264 = vpack.c.b16 %v257, %v257
    %v265 = vpack.c.b16 %v258, %v258
    %v266 = vpack.c.b16 %v259, %v259
    %v386 = vunpack.c.l.b16 %v130
    %v387 = vunpack.c.l.b16 %v131
    %v388 = vunpack.c.l.b16 %v132
    %v389 = vunpack.c.l.b16 %v133
    %v390 = vunpack.c.l.b16 %v134
    %v391 = vunpack.c.l.b16 %v135
    %v392 = vunpack.c.l.b16 %v136
    %v393 = vunpack.c.l.b16 %v137
    %v394 = vunpack.c.l.b16 %v138
    %v395 = vunpack.c.l.b16 %v139
    %v396 = vunpack.c.l.b16 %v140
    %v397 = vunpack.c.l.b16 %v141
    %v398 = vunpack.c.l.b16 %v142
    %v399 = vunpack.c.l.b16 %v143
    %v400 = vunpack.c.l.b16 %v144
    %v401 = vunpack.c.l.b16 %v145
    %v402 = vunpack.c.l.b16 %v146
    %v403 = vunpack.c.l.b16 %v147
    %v404 = vunpack.c.l.b16 %v148
    %v405 = vunpack.c.l.b16 %v149
    %v406 = vunpack.c.l.b16 %v150
    %v407 = vunpack.c.l.b16 %v151
    %v408 = vunpack.c.l.b16 %v152
    %v409 = vunpack.c.l.b16 %v153
    %v410 = vunpack.c.l.b16 %v154
    %v411 = vunpack.c.l.b16 %v155
    %v412 = vunpack.c.l.b16 %v156
    %v413 = vunpack.c.l.b16 %v157
    %v414 = vunpack.c.l.b16 %v158
    %v415 = vunpack.c.l.b16 %v159
    %v416 = vunpack.c.l.b16 %v160
    %v417 = vunpack.c.l.b16 %v161
    %v418 = vunpack.c.l.b16 %v162
    %v419 = vunpack.c.l.b16 %v163
    %v420 = vunpack.c.l.b16 %v164
    %v421 = vunpack.c.l.b16 %v165
    %v422 = vunpack.c.l.b16 %v166
    %v423 = vunpack.c.l.b16 %v167
    %v424 = vunpack.c.l.b16 %v168
    %v425 = vunpack.c.l.b16 %v169
    %v426 = vunpack.c.l.b16 %v170
    %v427 = vunpack.c.l.b16 %v171
    %v428 = vunpack.c.l.b16 %v172
    %v429 = vunpack.c.l.b16 %v173
    %v430 = vunpack.c.l.b16 %v174
    %v431 = vunpack.c.l.b16 %v175
    %v432 = vunpack.c.l.b16 %v176
    %v433 = vunpack.c.l.b16 %v177
    %v434 = vunpack.c.l.b16 %v178
    %v435 = vunpack.c.l.b16 %v179
    %v436 = vunpack.c.l.b16 %v180
    %v437 = vunpack.c.l.b16 %v181
    %v438 = vunpack.c.l.b16 %v182
    %v439 = vunpack.c.l.b16 %v183
    %v440 = vunpack.c.l.b16 %v184
    %v441 = vunpack.c.l.b16 %v185
    %v442 = vunpack.c.l.b16 %v186
    %v443 = vunpack.c.l.b16 %v187
    %v444 = vunpack.c.l.b16 %v188
    %v445 = vunpack.c.l.b16 %v189
    %v446 = vunpack.c.l.b16 %v190
    %v447 = vunpack.c.l.b16 %v191
    %v448 = vunpack.c.l.b16 %v192
    %v449 = vunpack.c.l.b16 %v193
    %v450 = vunpack.c.l.b16 %v194
    %v451 = vunpack.c.l.b16 %v195
    %v452 = vunpack.c.l.b16 %v196
    %v453 = vunpack.c.l.b16 %v197
    %v454 = vunpack.c.l.b16 %v198
    %v455 = vunpack.c.l.b16 %v199
    %v456 = vunpack.c.l.b16 %v200
    %v457 = vunpack.c.l.b16 %v201
    %v458 = vunpack.c.l.b16 %v202
    %v459 = vunpack.c.l.b16 %v203
    %v460 = vunpack.c.l.b16 %v204
    %v461 = vunpack.c.l.b16 %v205
    %v462 = vunpack.c.l.b16 %v206
    %v463 = vunpack.c.l.b16 %v207
    %v464 = vunpack.c.l.b16 %v208
    %v465 = vunpack.c.l.b16 %v209
    %v466 = vunpack.c.l.b16 %v210
    %v467 = vunpack.c.l.b16 %v211
    %v468 = vunpack.c.l.b16 %v212
    %v469 = vunpack.c.l.b16 %v213
    %v470 = vunpack.c.l.b16 %v214
    %v471 = vunpack.c.l.b16 %v215
    %v472 = vunpack.c.l.b16 %v216
    %v473 = vunpack.c.l.b16 %v217
    %v474 = vunpack.c.l.b16 %v218
    %v475 = vunpack.c.l.b16 %v219
    %v476 = vunpack.c.l.b16 %v220
    %v477 = vunpack.c.l.b16 %v221
    %v478 = vunpack.c.l.b16 %v222
    %v479 = vunpack.c.l.b16 %v223
    %v480 = vunpack.c.l.b16 %v224
    %v481 = vunpack.c.l.b16 %v225
    %v482 = vunpack.c.l.b16 %v226
    %v483 = vunpack.c.l.b16 %v227
    %v484 = vunpack.c.l.b16 %v228
    %v485 = vunpack.c.l.b16 %v229
    %v486 = vunpack.c.l.b16 %v230
    %v487 = vunpack.c.l.b16 %v231
    %v488 = vunpack.c.l.b16 %v232
    %v489 = vunpack.c.l.b16 %v233
    %v490 = vunpack.c.l.b16 %v234
    %v491 = vunpack.c.l.b16 %v235
    %v492 = vunpack.c.l.b16 %v236
    %v493 = vunpack.c.l.b16 %v237
    %v494 = vunpack.c.l.b16 %v238
    %v495 = vunpack.c.l.b16 %v239
    %v496 = vunpack.c.l.b16 %v240
    %v497 = vunpack.c.l.b16 %v241
    %v498 = vpack.c.b16 %v387, %v386
    %v499 = vpack.c.b16 %v389, %v388
    %v500 = vpack.c.b16 %v391, %v390
    %v501 = vpack.c.b16 %v393, %v392
    %v502 = vpack.c.b16 %v395, %v394
    %v503 = vpack.c.b16 %v397, %v396
    %v504 = vpack.c.b16 %v399, %v398
    %v505 = vpack.c.b16 %v401, %v400
    %v506 = vpack.c.b16 %v403, %v402
    %v507 = vpack.c.b16 %v405, %v404
    %v508 = vpack.c.b16 %v407, %v406
    %v509 = vpack.c.b16 %v409, %v408
    %v510 = vpack.c.b16 %v411, %v410
    %v511 = vpack.c.b16 %v413, %v412
    %v512 = vpack.c.b16 %v415, %v414
    %v513 = vpack.c.b16 %v417, %v416
    %v514 = vpack.c.b16 %v419, %v418
    %v515 = vpack.c.b16 %v421, %v420
    %v516 = vpack.c.b16 %v423, %v422
    %v517 = vpack.c.b16 %v425, %v424
    %v518 = vpack.c.b16 %v427, %v426
    %v519 = vpack.c.b16 %v429, %v428
    %v520 = vpack.c.b16 %v431, %v430
    %v521 = vpack.c.b16 %v433, %v432
    %v522 = vpack.c.b16 %v435, %v434
    %v523 = vpack.c.b16 %v437, %v436
    %v524 = vpack.c.b16 %v439, %v438
    %v525 = vpack.c.b16 %v441, %v440
    %v526 = vpack.c.b16 %v443, %v442
    %v527 = vpack.c.b16 %v445, %v444
    %v528 = vpack.c.b16 %v447, %v446
    %v529 = vpack.c.b16 %v449, %v448
    %v530 = vpack.c.b16 %v451, %v450
    %v531 = vpack.c.b16 %v453, %v452
    %v532 = vpack.c.b16 %v455, %v454
    %v533 = vpack.c.b16 %v457, %v456
    %v534 = vpack.c.b16 %v459, %v458
    %v535 = vpack.c.b16 %v461, %v460
    %v536 = vpack.c.b16 %v463, %v462
    %v537 = vpack.c.b16 %v465, %v464
    %v538 = vpack.c.b16 %v467, %v466
    %v539 = vpack.c.b16 %v469, %v468
    %v540 = vpack.c.b16 %v471, %v470
    %v541 = vpack.c.b16 %v473, %v472
    %v542 = vpack.c.b16 %v475, %v474
    %v543 = vpack.c.b16 %v477, %v476
    %v544 = vpack.c.b16 %v479, %v478
    %v545 = vpack.c.b16 %v481, %v480
    %v546 = vpack.c.b16 %v483, %v482
    %v547 = vpack.c.b16 %v485, %v484
    %v548 = vpack.c.b16 %v487, %v486
    %v549 = vpack.c.b16 %v489, %v488
    %v550 = vpack.c.b16 %v491, %v490
    %v551 = vpack.c.b16 %v493, %v492
    %v552 = vpack.c.b16 %v495, %v494
    %v553 = vpack.c.b16 %v497, %v496
    %610 = vmatprep.subr.bf16.mxu0 0
    %611 = vmatpush1.bf16.msra.mxu0 %v498
    %612 = vmatprep.subr.bf16.mxu0 0
    %613 = vmatpush1.bf16.msra.mxu0 %v499
    %614 = vmatprep.subr.bf16.mxu0 0
    %615 = vmatpush1.bf16.msra.mxu0 %v500
    %616 = vmatprep.subr.bf16.mxu0 0
    %617 = vmatpush1.bf16.msra.mxu0 %v501
    %618 = vmatprep.subr.bf16.mxu0 0
    %619 = vmatpush1.bf16.msra.mxu0 %v502
    %620 = vmatprep.subr.bf16.mxu0 0
    %621 = vmatpush1.bf16.msra.mxu0 %v503
    %622 = vmatprep.subr.bf16.mxu0 0
    %623 = vmatpush1.bf16.msra.mxu0 %v504
    %624 = vmatprep.subr.bf16.mxu0 0
    %625 = vmatpush1.bf16.msra.mxu0 %v505
    %626 = vmatprep.subr.bf16.mxu0 0
    %627 = vmatpush1.bf16.msra.mxu0 %v506
    %628 = vmatprep.subr.bf16.mxu0 0
    %629 = vmatpush1.bf16.msra.mxu0 %v507
    %630 = vmatprep.subr.bf16.mxu0 0
    %631 = vmatpush1.bf16.msra.mxu0 %v508
    %632 = vmatprep.subr.bf16.mxu0 0
    %633 = vmatpush1.bf16.msra.mxu0 %v509
    %634 = vmatprep.subr.bf16.mxu0 0
    %635 = vmatpush1.bf16.msra.mxu0 %v510
    %636 = vmatprep.subr.bf16.mxu0 0
    %637 = vmatpush1.bf16.msra.mxu0 %v511
    %638 = vmatprep.subr.bf16.mxu0 0
    %639 = vmatpush1.bf16.msra.mxu0 %v512
    %640 = vmatprep.subr.bf16.mxu0 0
    %641 = vmatpush1.bf16.msra.mxu0 %v513
    %642 = vmatprep.mubr.bf16.mxu0 %v261
    %643 = vmatmul.mubr.bf16.gmra.mrb[0].mxu0 %v260
    %v644 = vpop.f32.mrb[0].mxu0
    %v645 = vadd.f32 %v247, %v644
    %v646 = vpop.f32.mrb[0].mxu0
    %v647 = vpop.f32.mrb[0].mxu0
    %v648 = vpop.f32.mrb[0].mxu0
    %649 = vdwg.mxu0
    %650 = vmatprep.subr.bf16.mxu0 0
    %651 = vmatpush1.bf16.msra.mxu0 %v514
    %652 = vmatprep.subr.bf16.mxu0 0
    %653 = vmatpush1.bf16.msra.mxu0 %v515
    %654 = vmatprep.subr.bf16.mxu0 0
    %655 = vmatpush1.bf16.msra.mxu0 %v516
    %656 = vmatprep.subr.bf16.mxu0 0
    %657 = vmatpush1.bf16.msra.mxu0 %v517
    %658 = vmatprep.subr.bf16.mxu0 0
    %659 = vmatpush1.bf16.msra.mxu0 %v518
    %660 = vmatprep.subr.bf16.mxu0 0
    %661 = vmatpush1.bf16.msra.mxu0 %v519
    %662 = vmatprep.subr.bf16.mxu0 0
    %663 = vmatpush1.bf16.msra.mxu0 %v520
    %664 = vmatprep.subr.bf16.mxu0 0
    %665 = vmatpush1.bf16.msra.mxu0 %v521
    %666 = vmatprep.subr.bf16.mxu0 0
    %667 = vmatpush1.bf16.msra.mxu0 %v522
    %668 = vmatprep.subr.bf16.mxu0 0
    %669 = vmatpush1.bf16.msra.mxu0 %v523
    %670 = vmatprep.subr.bf16.mxu0 0
    %671 = vmatpush1.bf16.msra.mxu0 %v524
    %672 = vmatprep.subr.bf16.mxu0 0
    %673 = vmatpush1.bf16.msra.mxu0 %v525
    %674 = vmatprep.subr.bf16.mxu0 0
    %675 = vmatpush1.bf16.msra.mxu0 %v526
    %676 = vmatprep.subr.bf16.mxu0 0
    %677 = vmatpush1.bf16.msra.mxu0 %v527
    %678 = vmatprep.subr.bf16.mxu0 0
    %679 = vmatpush1.bf16.msra.mxu0 %v528
    %680 = vmatprep.subr.bf16.mxu0 0
    %681 = vmatpush1.bf16.msra.mxu0 %v529
    %682 = vmatprep.mubr.bf16.mxu0 %v263
    %683 = vmatmul.mubr.bf16.gmra.mrb[0].mxu0 %v262
    %v684 = vpop.f32.mrb[0].mxu0
    %v685 = vadd.f32 %v645, %v684
    %v686 = vpop.f32.mrb[0].mxu0
    %v687 = vpop.f32.mrb[0].mxu0
    %v688 = vpop.f32.mrb[0].mxu0
    %689 = vdwg.mxu0
    %690 = vmatprep.subr.bf16.mxu0 0
    %691 = vmatpush1.bf16.msra.mxu0 %v530
    %692 = vmatprep.subr.bf16.mxu0 0
    %693 = vmatpush1.bf16.msra.mxu0 %v531
    %694 = vmatprep.subr.bf16.mxu0 0
    %695 = vmatpush1.bf16.msra.mxu0 %v532
    %696 = vmatprep.subr.bf16.mxu0 0
    %697 = vmatpush1.bf16.msra.mxu0 %v533
    %698 = vmatprep.subr.bf16.mxu0 0
    %699 = vmatpush1.bf16.msra.mxu0 %v534
    %700 = vmatprep.subr.bf16.mxu0 0
    %701 = vmatpush1.bf16.msra.mxu0 %v535
    %702 = vmatprep.subr.bf16.mxu0 0
    %703 = vmatpush1.bf16.msra.mxu0 %v536
    %704 = vmatprep.subr.bf16.mxu0 0
    %705 = vmatpush1.bf16.msra.mxu0 %v537
    %706 = vmatprep.subr.bf16.mxu0 0
    %707 = vmatpush1.bf16.msra.mxu0 %v538
    %708 = vmatprep.subr.bf16.mxu0 0
    %709 = vmatpush1.bf16.msra.mxu0 %v539
    %710 = vmatprep.subr.bf16.mxu0 0
    %711 = vmatpush1.bf16.msra.mxu0 %v540
    %712 = vmatprep.subr.bf16.mxu0 0
    %713 = vmatpush1.bf16.msra.mxu0 %v541
    %714 = vmatprep.subr.bf16.mxu0 0
    %715 = vmatpush1.bf16.msra.mxu0 %v542
    %716 = vmatprep.subr.bf16.mxu0 0
    %717 = vmatpush1.bf16.msra.mxu0 %v543
    %718 = vmatprep.subr.bf16.mxu0 0
    %719 = vmatpush1.bf16.msra.mxu0 %v544
    %720 = vmatprep.subr.bf16.mxu0 0
    %721 = vmatpush1.bf16.msra.mxu0 %v545
    %722 = vmatprep.mubr.bf16.mxu0 %v265
    %723 = vmatmul.mubr.bf16.gmra.mrb[0].mxu0 %v264
    %v724 = vpop.f32.mrb[0].mxu0
    %v725 = vadd.f32 %v685, %v724
    %v726 = vpop.f32.mrb[0].mxu0
    %v727 = vpop.f32.mrb[0].mxu0
    %v728 = vpop.f32.mrb[0].mxu0
    %729 = vdwg.mxu0
    %730 = vmatprep.subr.bf16.mxu0 0
    %731 = vmatpush1.bf16.msra.mxu0 %v546
    %732 = vmatprep.subr.bf16.mxu0 0
    %733 = vmatpush1.bf16.msra.mxu0 %v547
    %734 = vmatprep.subr.bf16.mxu0 0
    %735 = vmatpush1.bf16.msra.mxu0 %v548
    %736 = vmatprep.subr.bf16.mxu0 0
    %737 = vmatpush1.bf16.msra.mxu0 %v549
    %738 = vmatprep.subr.bf16.mxu0 0
    %739 = vmatpush1.bf16.msra.mxu0 %v550
    %740 = vmatprep.subr.bf16.mxu0 0
    %741 = vmatpush1.bf16.msra.mxu0 %v551
    %742 = vmatprep.subr.bf16.mxu0 0
    %743 = vmatpush1.bf16.msra.mxu0 %v552
    %744 = vmatprep.subr.bf16.mxu0 0
    %745 = vmatpush1.bf16.msra.mxu0 %v553
    %746 = vmatprep.subr.bf16.mxu0 0
    %747 = vmatpush1.bf16.msra.mxu0 0
    %748 = vmatprep.subr.bf16.mxu0 0
    %749 = vmatpush1.bf16.msra.mxu0 0
    %750 = vmatprep.subr.bf16.mxu0 0
    %751 = vmatpush1.bf16.msra.mxu0 0
    %752 = vmatprep.subr.bf16.mxu0 0
    %753 = vmatpush1.bf16.msra.mxu0 0
    %754 = vmatprep.subr.bf16.mxu0 0
    %755 = vmatpush1.bf16.msra.mxu0 0
    %756 = vmatprep.subr.bf16.mxu0 0
    %757 = vmatpush1.bf16.msra.mxu0 0
    %758 = vmatprep.subr.bf16.mxu0 0
    %759 = vmatpush1.bf16.msra.mxu0 0
    %760 = vmatprep.subr.bf16.mxu0 0
    %761 = vmatpush1.bf16.msra.mxu0 0
    %762 = vmatprep.mubr.bf16.mxu0 0
    %763 = vmatmul.mubr.bf16.gmra.mrb[0].mxu0 %v266
    %v764 = vpop.f32.mrb[0].mxu0
    %v765 = vadd.f32 %v725, %v764
    %v766 = vpop.f32.mrb[0].mxu0
    %v767 = vpop.f32.mrb[0].mxu0
    %v768 = vpop.f32.mrb[0].mxu0
    %769 = vdwg.mxu0
    %v770 = vmax.f32 %v765, 0.0
    %v771 = vpack.c.bf16 %v770, %v770
    %v772 = vld [vmem:[#allocation8] sm:$0xf]
    %v773 = vld [vmem:[#allocation8 + $0x4] sm:$0xf]
    %v774 = vld [vmem:[#allocation8 + $0x8] sm:$0xf]
    %v775 = vld [vmem:[#allocation8 + $0xc] sm:$0xf]
    %v776 = vld [vmem:[#allocation8 + $0x10] sm:$0xf]
    %v777 = vld [vmem:[#allocation8 + $0x14] sm:$0xf]
    %v778 = vld [vmem:[#allocation8 + $0x18] sm:$0xf]
    %v779 = vld [vmem:[#allocation8 + $0x1c] sm:$0xf]
    %v780 = vld [vmem:[#allocation8 + $0x20] sm:$0xf]
    %v781 = vld [vmem:[#allocation8 + $0x24] sm:$0xf]
    %v782 = vld [vmem:[#allocation8 + $0x28] sm:$0xf]
    %v783 = vld [vmem:[#allocation8 + $0x2c] sm:$0xf]
    %v784 = vld [vmem:[#allocation8 + $0x30] sm:$0xf]
    %v785 = vld [vmem:[#allocation8 + $0x34] sm:$0xf]
    %v786 = vld [vmem:[#allocation8 + $0x38] sm:$0xf]
    %v787 = vld [vmem:[#allocation8 + $0x3c] sm:$0xf]
    %v788 = vld [vmem:[%s4] sm:$0x1]
    %v790 = vlaneseq
    %v791 = vshrl.u32 %v790, 7
    %v792 = vsub.s32 0, %v791
    %v793 = vrot.slane %v788, %v792
    %v811 = vunpack.c.l.b16 %v772
    %v812 = vunpack.c.l.b16 %v773
    %v813 = vunpack.c.l.b16 %v774
    %v814 = vunpack.c.l.b16 %v775
    %v815 = vunpack.c.l.b16 %v776
    %v816 = vunpack.c.l.b16 %v777
    %v817 = vunpack.c.l.b16 %v778
    %v818 = vunpack.c.l.b16 %v779
    %v819 = vunpack.c.l.b16 %v780
    %v820 = vunpack.c.l.b16 %v781
    %v821 = vunpack.c.l.b16 %v782
    %v822 = vunpack.c.l.b16 %v783
    %v823 = vunpack.c.l.b16 %v784
    %v824 = vunpack.c.l.b16 %v785
    %v825 = vunpack.c.l.b16 %v786
    %v826 = vunpack.c.l.b16 %v787
    %v827 = vpack.c.b16 %v812, %v811
    %v828 = vpack.c.b16 %v814, %v813
    %v829 = vpack.c.b16 %v816, %v815
    %v830 = vpack.c.b16 %v818, %v817
    %v831 = vpack.c.b16 %v820, %v819
    %v832 = vpack.c.b16 %v822, %v821
    %v833 = vpack.c.b16 %v824, %v823
    %v834 = vpack.c.b16 %v826, %v825
    %843 = vmatprep.subr.bf16.mxu0 0
    %844 = vmatpush1.bf16.msra.mxu0 %v827
    %845 = vmatprep.subr.bf16.mxu0 0
    %846 = vmatpush1.bf16.msra.mxu0 %v828
    %847 = vmatprep.subr.bf16.mxu0 0
    %848 = vmatpush1.bf16.msra.mxu0 %v829
    %849 = vmatprep.subr.bf16.mxu0 0
    %850 = vmatpush1.bf16.msra.mxu0 %v830
    %851 = vmatprep.subr.bf16.mxu0 0
    %852 = vmatpush1.bf16.msra.mxu0 %v831
    %853 = vmatprep.subr.bf16.mxu0 0
    %854 = vmatpush1.bf16.msra.mxu0 %v832
    %855 = vmatprep.subr.bf16.mxu0 0
    %856 = vmatpush1.bf16.msra.mxu0 %v833
    %857 = vmatprep.subr.bf16.mxu0 0
    %858 = vmatpush1.bf16.msra.mxu0 %v834
    %859 = vmatprep.subr.bf16.mxu0 0
    %860 = vmatpush1.bf16.msra.mxu0 0
    %861 = vmatprep.subr.bf16.mxu0 0
    %862 = vmatpush1.bf16.msra.mxu0 0
    %863 = vmatprep.subr.bf16.mxu0 0
    %864 = vmatpush1.bf16.msra.mxu0 0
    %865 = vmatprep.subr.bf16.mxu0 0
    %866 = vmatpush1.bf16.msra.mxu0 0
    %867 = vmatprep.subr.bf16.mxu0 0
    %868 = vmatpush1.bf16.msra.mxu0 0
    %869 = vmatprep.subr.bf16.mxu0 0
    %870 = vmatpush1.bf16.msra.mxu0 0
    %871 = vmatprep.subr.bf16.mxu0 0
    %872 = vmatpush1.bf16.msra.mxu0 0
    %873 = vmatprep.subr.bf16.mxu0 0
    %874 = vmatpush1.bf16.msra.mxu0 0
    %875 = vmatprep.mubr.bf16.mxu0 0
    %876 = vmatmul.mubr.bf16.gmra.mrb[0].mxu0 %v771
    %v877 = vpop.f32.mrb[0].mxu0
    %v878 = vadd.f32 %v793, %v877
    %v879 = vpop.f32.mrb[0].mxu0
    %v880 = vpop.f32.mrb[0].mxu0
    %v881 = vpop.f32.mrb[0].mxu0
    %882 = vdwg.mxu0
    %v883 = vmax.f32 %v878, 0.0
    %v884 = vpack.c.bf16 %v883, %v883
    %v885 = vld [vmem:[#allocation9] sm:$0xf]
    %v886 = vld [vmem:[#allocation9 + $0x4] sm:$0xf]
    %v887 = vld [vmem:[#allocation9 + $0x8] sm:$0xf]
    %v888 = vld [vmem:[#allocation9 + $0xc] sm:$0xf]
    %v889 = vld [vmem:[#allocation9 + $0x10] sm:$0xf]
    %v890 = vld [vmem:[#allocation9 + $0x14] sm:$0xf]
    %v891 = vld [vmem:[#allocation9 + $0x18] sm:$0xf]
    %v892 = vld [vmem:[#allocation9 + $0x1c] sm:$0xf]
    %v893 = vld [vmem:[#allocation9 + $0x20] sm:$0xf]
    %v894 = vld [vmem:[#allocation9 + $0x24] sm:$0xf]
    %v895 = vld [vmem:[#allocation9 + $0x28] sm:$0xf]
    %v896 = vld [vmem:[#allocation9 + $0x2c] sm:$0xf]
    %v897 = vld [vmem:[#allocation9 + $0x30] sm:$0xf]
    %v898 = vld [vmem:[#allocation9 + $0x34] sm:$0xf]
    %v899 = vld [vmem:[#allocation9 + $0x38] sm:$0xf]
    %v900 = vld [vmem:[#allocation9 + $0x3c] sm:$0xf]
    %v901 = vld [vmem:[%s6] sm:$0x1]
    %v903 = vlaneseq
    %v904 = vshrl.u32 %v903, 7
    %v905 = vsub.s32 0, %v904
    %v906 = vrot.slane %v901, %v905
    %v924 = vunpack.c.l.b16 %v885
    %v925 = vunpack.c.l.b16 %v886
    %v926 = vunpack.c.l.b16 %v887
    %v927 = vunpack.c.l.b16 %v888
    %v928 = vunpack.c.l.b16 %v889
    %v929 = vunpack.c.l.b16 %v890
    %v930 = vunpack.c.l.b16 %v891
    %v931 = vunpack.c.l.b16 %v892
    %v932 = vunpack.c.l.b16 %v893
    %v933 = vunpack.c.l.b16 %v894
    %v934 = vunpack.c.l.b16 %v895
    %v935 = vunpack.c.l.b16 %v896
    %v936 = vunpack.c.l.b16 %v897
    %v937 = vunpack.c.l.b16 %v898
    %v938 = vunpack.c.l.b16 %v899
    %v939 = vunpack.c.l.b16 %v900
    %v940 = vpack.c.b16 %v925, %v924
    %v941 = vpack.c.b16 %v927, %v926
    %v942 = vpack.c.b16 %v929, %v928
    %v943 = vpack.c.b16 %v931, %v930
    %v944 = vpack.c.b16 %v933, %v932
    %v945 = vpack.c.b16 %v935, %v934
    %v946 = vpack.c.b16 %v937, %v936
    %v947 = vpack.c.b16 %v939, %v938
    %956 = vmatprep.subr.bf16.mxu0 0
    %957 = vmatpush1.bf16.msra.mxu0 %v940
    %958 = vmatprep.subr.bf16.mxu0 0
    %959 = vmatpush1.bf16.msra.mxu0 %v941
    %960 = vmatprep.subr.bf16.mxu0 0
    %961 = vmatpush1.bf16.msra.mxu0 %v942
    %962 = vmatprep.subr.bf16.mxu0 0
    %963 = vmatpush1.bf16.msra.mxu0 %v943
    %964 = vmatprep.subr.bf16.mxu0 0
    %965 = vmatpush1.bf16.msra.mxu0 %v944
    %966 = vmatprep.subr.bf16.mxu0 0
    %967 = vmatpush1.bf16.msra.mxu0 %v945
    %968 = vmatprep.subr.bf16.mxu0 0
    %969 = vmatpush1.bf16.msra.mxu0 %v946
    %970 = vmatprep.subr.bf16.mxu0 0
    %971 = vmatpush1.bf16.msra.mxu0 %v947
    %972 = vmatprep.subr.bf16.mxu0 0
    %973 = vmatpush1.bf16.msra.mxu0 0
    %974 = vmatprep.subr.bf16.mxu0 0
    %975 = vmatpush1.bf16.msra.mxu0 0
    %976 = vmatprep.subr.bf16.mxu0 0
    %977 = vmatpush1.bf16.msra.mxu0 0
    %978 = vmatprep.subr.bf16.mxu0 0
    %979 = vmatpush1.bf16.msra.mxu0 0
    %980 = vmatprep.subr.bf16.mxu0 0
    %981 = vmatpush1.bf16.msra.mxu0 0
    %982 = vmatprep.subr.bf16.mxu0 0
    %983 = vmatpush1.bf16.msra.mxu0 0
    %984 = vmatprep.subr.bf16.mxu0 0
    %985 = vmatpush1.bf16.msra.mxu0 0
    %986 = vmatprep.subr.bf16.mxu0 0
    %987 = vmatpush1.bf16.msra.mxu0 0
    %988 = vmatprep.mubr.bf16.mxu0 0
    %989 = vmatmul.mubr.bf16.gmra.mrb[0].mxu0 %v884
    %v990 = vpop.f32.mrb[0].mxu0
    %v991 = vadd.f32 %v906, %v990
    %v992 = vpop.f32.mrb[0].mxu0
    %v993 = vpop.f32.mrb[0].mxu0
    %v994 = vpop.f32.mrb[0].mxu0
    %995 = vdwg.mxu0
    %v996 = vmax.f32 %v991, 0.0
    %997 = vst [vmem:[#allocation11] sm:$0xff] %v996
    // Predicated region
    $region46: #{encoder_forward.1} parent=1 // pred_check
      _
    $region47: #{encoder_forward.1} parent=1 // pred_check_branch
      %999 = sbr.rel (0) target = $region49
    $region48: #{encoder_forward.1} parent=1 // pred_region
      %s1001 = ssub.s32 128, 128
      %1002 = vsyncadd [#allocation5], %s1001
      %s1004 = sshll.u32 [#allocation11], 4
      %s1005 = int_to_ptr.vmem [resolvable:$true] %s1004
      %1007 = dma.vmem_to_hbm [thread:$0]  %s1005, 128, %s7, [#allocation5]
    $region49: #{encoder_forward.1} parent=1 // pred_fallthru
      _
    // Predicated region
    $region50: #{encoder_forward.1} parent=1 // pred_check
      _
    $region51: #{encoder_forward.1} parent=1 // pred_check_branch
      %1009 = sbr.rel (0) target = $region53
    $region52: #{encoder_forward.1} parent=1 // pred_region
      %1010 = dma.done [#allocation5], 128
    $region53: #{encoder_forward.1} parent=1 // pred_fallthru
      _
    %1011 = vsyncpa [#allocation4], 1
    %1012 = vsyncpa [#allocation7], 1
    %1013 = vsyncpa [#allocation10], 1
    %1014 = vsyncpa [#allocation5], 1

</llo_original>
